<compile_context>
chip_gen: v7x
topology: tpu7x:2x2x1
jax: 0.10.0
libtpu: 0.0.40
codegen_flags: <defaults>
</compile_context>

<pallas_src>
import functools
import math

import jax
import jax.numpy as jnp
from jax import lax
from jax.experimental import pallas as pl
from jax.experimental.pallas import tpu as pltpu


def _pick_tile(n, target):
    """Largest multiple-of-8 divisor of n that is <= target (or n itself)."""
    if n <= target:
        return n
    for t in range(min(target, n), 7, -1):
        if n % t == 0 and t % 8 == 0:
            return t
    return n  # full dimension is always a legal block


def _full_attention_kernel(q_ref, k_ref, v_ref, o_ref, acc_ref, *,
                           H, E, D, compute_dtype):
    # q_ref: (1, tL, H*E)  k_ref: (1, tS, H*E)  v_ref: (1, tS, H*D)
    # o_ref: (1, tL, H*D)  acc_ref: (H, tL, D) f32 scratch
    s_idx = pl.program_id(2)

    @pl.when(s_idx == 0)
    def _init():
        acc_ref[...] = jnp.zeros_like(acc_ref)

    q = q_ref[0]          # (tL, H*E)
    k = k_ref[0]          # (tS, H*E)
    v = v_ref[0]          # (tS, H*D)

    for h in range(H):
        qh = q[:, h * E:(h + 1) * E]          # (tL, E)
        kh = k[:, h * E:(h + 1) * E]          # (tS, E)
        vh = v[:, h * D:(h + 1) * D]          # (tS, D)
        if compute_dtype is not None:         # opt-in bf16 MXU feed
            qh = qh.astype(compute_dtype)
            kh = kh.astype(compute_dtype)
        # scores[l, s] = sum_e q[l,h,e] * k[s,h,e]; contract last dims of both
        # operands so the "K transposed" form is handled inside the MXU.
        scores = lax.dot_general(qh, kh, (((1,), (1,)), ((), ())),
                                 preferred_element_type=jnp.float32)   # (tL, tS)
        # Reference quirk: the RAW scores (no mask/scale/softmax/dropout)
        # multiply the values.
        if compute_dtype is None:
            lhs, rhs = scores, vh.astype(scores.dtype)
        else:
            lhs, rhs = scores.astype(compute_dtype), vh.astype(compute_dtype)
        acc_ref[h] += lax.dot_general(lhs, rhs, (((1,), (0,)), ((), ())),
                                      preferred_element_type=jnp.float32)  # (tL, D)

    @pl.when(s_idx == pl.num_programs(2) - 1)
    def _writeback():
        for h in range(H):
            o_ref[0, :, h * D:(h + 1) * D] = acc_ref[h].astype(o_ref.dtype)


def full_attention(queries, keys, values, attn_mask=None, *, mask_flag=True,
                   scale=None, output_attention=False,
                   tl_target=256, ts_target=256, compute_dtype=None,
                   vmem_limit_bytes=32 * 1024 * 1024):
    """Pallas implementation of FullAttention.forward (eval mode, dropout = id).

    attn_mask / mask_flag are accepted for signature fidelity but are dead code
    in the reference (masked_fill is not in-place), so they are ignored here.
    """
    B, L, H, E = queries.shape
    _, S, _, D = values.shape

    # Free reshapes (no transpose, no extra HBM pass): heads stay packed in the
    # lane dimension -> contiguous DMA + lane-dense output writes.
    q3 = queries.reshape(B, L, H * E)
    k3 = keys.reshape(B, S, H * E)
    v3 = values.reshape(B, S, H * D)

    tL = _pick_tile(L, tl_target)
    tS = _pick_tile(S, ts_target)
    grid = (B, L // tL, S // tS)

    kernel = functools.partial(_full_attention_kernel, H=H, E=E, D=D,
                               compute_dtype=compute_dtype)

    itemsize = queries.dtype.itemsize
    cost = pl.CostEstimate(
        flops=2 * B * H * L * S * (E + D),
        transcendentals=0,
        bytes_accessed=(q3.size + k3.size + v3.size + B * L * H * D) * itemsize)

    out3 = pl.pallas_call(
        kernel,
        out_shape=jax.ShapeDtypeStruct((B, L, H * D), queries.dtype),
        grid=grid,
        in_specs=[
            pl.BlockSpec((1, tL, H * E), lambda b, i, s: (b, i, 0)),
            # K/V maps ignore the L-tile index -> blocks stay resident across
            # L tiles whenever S fits in a single block.
            pl.BlockSpec((1, tS, H * E), lambda b, i, s: (b, s, 0)),
            pl.BlockSpec((1, tS, H * D), lambda b, i, s: (b, s, 0)),
        ],
        out_specs=pl.BlockSpec((1, tL, H * D), lambda b, i, s: (b, i, 0)),
        scratch_shapes=[pltpu.VMEM((H, tL, D), jnp.float32)],
        compiler_params=pltpu.CompilerParams(
            dimension_semantics=("parallel", "parallel", "arbitrary"),
            vmem_limit_bytes=vmem_limit_bytes),
        cost_estimate=cost,
    )(q3, k3, v3)

    V = out3.reshape(B, L, H, D)

    A = None
    if output_attention:
        # Attention probabilities are only returned, never feed V.  The mask is
        # dead code in the reference (masked_fill not in-place) and dropout is
        # identity in eval, so A = softmax(scale * scores).
        scl = scale if scale is not None else 1.0 / math.sqrt(E)
        scores = jnp.einsum('blhe,bshe->bhls', queries, keys)
        A = jax.nn.softmax(scl * scores, axis=-1)
    return V, A


def _reference(queries, keys, values):
    scores = jnp.einsum('blhe,bshe->bhls', queries, keys)
    return jnp.einsum('bhls,bshd->blhd', scores, values)


if __name__ == "__main__":
    # Case 1: module-like small shape (single S block, H*E = H*D = 128 lanes).
    B, L, S, H, E, D = 2, 8, 8, 4, 32, 32
    kq, kk, kv = jax.random.split(jax.random.PRNGKey(0), 3)
    queries = jax.random.normal(kq, (B, L, H, E), dtype=jnp.float32)
    keys_ = jax.random.normal(kk, (B, S, H, E), dtype=jnp.float32)
    values = jax.random.normal(kv, (B, S, H, D), dtype=jnp.float32)
    V, A = full_attention(queries, keys_, values, attn_mask=None)
    V = jax.block_until_ready(V)
    ref = _reference(queries, keys_, values)
    assert V.shape == (B, L, H, D)
    assert jnp.allclose(V, ref, atol=1e-3, rtol=1e-4), "case 1 mismatch vs reference"

    # Case 2: forces multiple L tiles and a multi-step S reduction (accumulator path).
    B, L, S, H, E, D = 2, 32, 48, 2, 16, 8
    kq, kk, kv = jax.random.split(jax.random.PRNGKey(1), 3)
    queries = jax.random.normal(kq, (B, L, H, E), dtype=jnp.float32)
    keys_ = jax.random.normal(kk, (B, S, H, E), dtype=jnp.float32)
    values = jax.random.normal(kv, (B, S, H, D), dtype=jnp.float32)
    V2, _ = full_attention(queries, keys_, values, attn_mask=None,
                           tl_target=16, ts_target=16)
    V2 = jax.block_until_ready(V2)
    ref2 = _reference(queries, keys_, values)
    assert V2.shape == (B, L, H, D)
    assert jnp.allclose(V2, ref2, atol=1e-3, rtol=1e-4), "case 2 mismatch vs reference"

    print("KERNEL_OK")
</pallas_src>

<mosaic_0001>
module attributes {stable_mosaic.version = 11 : i64} {
  func.func @_full_attention_kernel(%arg0: i32, %arg1: i32, %arg2: i32, %arg3: memref<1x8x128xf32, #tpu.memory_space<vmem>>, %arg4: memref<1x8x128xf32, #tpu.memory_space<vmem>>, %arg5: memref<1x8x128xf32, #tpu.memory_space<vmem>>, %arg6: memref<1x8x128xf32, #tpu.memory_space<vmem>>, %arg7: memref<4x8x32xf32, #tpu.memory_space<vmem>>) attributes {dimension_semantics = [#tpu.dimension_semantics<parallel>, #tpu.dimension_semantics<parallel>, #tpu.dimension_semantics<arbitrary>], iteration_bounds = array<i64: 2, 1, 1>, scalar_prefetch = 0 : i64, scratch_operands = 1 : i64, tpu.core_type = #tpu.core_type<tc>, window_params = [{transform_indices = @transform_0, window_bounds = array<i64: 1, 8, 128>}, {transform_indices = @transform_1, window_bounds = array<i64: 1, 8, 128>}, {transform_indices = @transform_2, window_bounds = array<i64: 1, 8, 128>}, {transform_indices = @transform_3, window_bounds = array<i64: 1, 8, 128>}]} {
    %c0_i32 = arith.constant 0 : i32
    %0 = arith.cmpi eq, %arg2, %c0_i32 : i32
    %1 = arith.extui %0 : i1 to i32
    %c0_i32_0 = arith.constant 0 : i32
    %2 = arith.cmpi ne, %1, %c0_i32_0 : i32
    scf.if %2 {
      %cst_39 = arith.constant 0.000000e+00 : f32
      %56 = vector.broadcast %cst_39 : f32 to vector<4x8x32xf32>
      %c0_40 = arith.constant 0 : index
      %c0_41 = arith.constant 0 : index
      %c0_42 = arith.constant 0 : index
      %57 = vector.load %arg7[%c0_40, %c0_41, %c0_42] : memref<4x8x32xf32, #tpu.memory_space<vmem>>, vector<4x8x32xf32>
      tpu.vector_store %arg7[%c0_40, %c0_41, %c0_42], %56 {strides = array<i32>} : memref<4x8x32xf32, #tpu.memory_space<vmem>>, vector<4x8x32xf32>,
    } else {
    }
    %c0 = arith.constant 0 : index
    %c0_1 = arith.constant 0 : index
    %c0_2 = arith.constant 0 : index
    %3 = vector.load %arg3[%c0, %c0_1, %c0_2] : memref<1x8x128xf32, #tpu.memory_space<vmem>>, vector<1x8x128xf32>
    %4 = vector.shape_cast %3 : vector<1x8x128xf32> to vector<8x128xf32>
    %c0_3 = arith.constant 0 : index
    %c0_4 = arith.constant 0 : index
    %c0_5 = arith.constant 0 : index
    %5 = vector.load %arg4[%c0_3, %c0_4, %c0_5] : memref<1x8x128xf32, #tpu.memory_space<vmem>>, vector<1x8x128xf32>
    %6 = vector.shape_cast %5 : vector<1x8x128xf32> to vector<8x128xf32>
    %c0_6 = arith.constant 0 : index
    %c0_7 = arith.constant 0 : index
    %c0_8 = arith.constant 0 : index
    %7 = vector.load %arg5[%c0_6, %c0_7, %c0_8] : memref<1x8x128xf32, #tpu.memory_space<vmem>>, vector<1x8x128xf32>
    %8 = vector.shape_cast %7 : vector<1x8x128xf32> to vector<8x128xf32>
    %9 = vector.extract_strided_slice %4 {offsets = [0, 0], sizes = [8, 32], strides = [1, 1]} : vector<8x128xf32> to vector<8x32xf32>
    %10 = vector.extract_strided_slice %6 {offsets = [0, 0], sizes = [8, 32], strides = [1, 1]} : vector<8x128xf32> to vector<8x32xf32>
    %11 = vector.extract_strided_slice %8 {offsets = [0, 0], sizes = [8, 32], strides = [1, 1]} : vector<8x128xf32> to vector<8x32xf32>
    %cst = arith.constant dense<0.000000e+00> : vector<8x8xf32>
    %12 = tpu.matmul %9, %10, %cst {dimension_numbers = #tpu.dot_dimension_numbers<[1], [1], [0], [0], [0, 0, 1, 0], [], []>} : vector<8x32xf32>, vector<8x32xf32>, vector<8x8xf32> -> vector<8x8xf32>
    %c0_9 = arith.constant 0 : index
    %c0_10 = arith.constant 0 : index
    %c0_11 = arith.constant 0 : index
    %13 = vector.load %arg7[%c0_9, %c0_10, %c0_11] : memref<4x8x32xf32, #tpu.memory_space<vmem>>, vector<1x8x32xf32>
    %14 = vector.shape_cast %13 : vector<1x8x32xf32> to vector<8x32xf32>
    %cst_12 = arith.constant dense<0.000000e+00> : vector<8x32xf32>
    %15 = tpu.matmul %12, %11, %cst_12 {dimension_numbers = #tpu.dot_dimension_numbers<[1], [0], [0], [1], [0, 0, 1, 1], [], []>} : vector<8x8xf32>, vector<8x32xf32>, vector<8x32xf32> -> vector<8x32xf32>
    %16 = arith.addf %14, %15 : vector<8x32xf32>
    %c0_13 = arith.constant 0 : index
    %c0_14 = arith.constant 0 : index
    %c0_15 = arith.constant 0 : index
    %17 = vector.load %arg7[%c0_13, %c0_14, %c0_15] : memref<4x8x32xf32, #tpu.memory_space<vmem>>, vector<1x8x32xf32>
    %18 = vector.shape_cast %17 : vector<1x8x32xf32> to vector<8x32xf32>
    %19 = vector.shape_cast %16 : vector<8x32xf32> to vector<1x8x32xf32>
    tpu.vector_store %arg7[%c0_13, %c0_14, %c0_15], %19 {strides = array<i32>} : memref<4x8x32xf32, #tpu.memory_space<vmem>>, vector<1x8x32xf32>,
    %20 = vector.extract_strided_slice %4 {offsets = [0, 32], sizes = [8, 32], strides = [1, 1]} : vector<8x128xf32> to vector<8x32xf32>
    %21 = vector.extract_strided_slice %6 {offsets = [0, 32], sizes = [8, 32], strides = [1, 1]} : vector<8x128xf32> to vector<8x32xf32>
    %22 = vector.extract_strided_slice %8 {offsets = [0, 32], sizes = [8, 32], strides = [1, 1]} : vector<8x128xf32> to vector<8x32xf32>
    %cst_16 = arith.constant dense<0.000000e+00> : vector<8x8xf32>
    %23 = tpu.matmul %20, %21, %cst_16 {dimension_numbers = #tpu.dot_dimension_numbers<[1], [1], [0], [0], [0, 0, 1, 0], [], []>} : vector<8x32xf32>, vector<8x32xf32>, vector<8x8xf32> -> vector<8x8xf32>
    %c1 = arith.constant 1 : index
    %c0_17 = arith.constant 0 : index
    %c0_18 = arith.constant 0 : index
    %24 = vector.load %arg7[%c1, %c0_17, %c0_18] : memref<4x8x32xf32, #tpu.memory_space<vmem>>, vector<1x8x32xf32>
    %25 = vector.shape_cast %24 : vector<1x8x32xf32> to vector<8x32xf32>
    %cst_19 = arith.constant dense<0.000000e+00> : vector<8x32xf32>
    %26 = tpu.matmul %23, %22, %cst_19 {dimension_numbers = #tpu.dot_dimension_numbers<[1], [0], [0], [1], [0, 0, 1, 1], [], []>} : vector<8x8xf32>, vector<8x32xf32>, vector<8x32xf32> -> vector<8x32xf32>
    %27 = arith.addf %25, %26 : vector<8x32xf32>
    %c1_20 = arith.constant 1 : index
    %c0_21 = arith.constant 0 : index
    %c0_22 = arith.constant 0 : index
    %28 = vector.load %arg7[%c1_20, %c0_21, %c0_22] : memref<4x8x32xf32, #tpu.memory_space<vmem>>, vector<1x8x32xf32>
    %29 = vector.shape_cast %28 : vector<1x8x32xf32> to vector<8x32xf32>
    %30 = vector.shape_cast %27 : vector<8x32xf32> to vector<1x8x32xf32>
    tpu.vector_store %arg7[%c1_20, %c0_21, %c0_22], %30 {strides = array<i32>} : memref<4x8x32xf32, #tpu.memory_space<vmem>>, vector<1x8x32xf32>,
    %31 = vector.extract_strided_slice %4 {offsets = [0, 64], sizes = [8, 32], strides = [1, 1]} : vector<8x128xf32> to vector<8x32xf32>
    %32 = vector.extract_strided_slice %6 {offsets = [0, 64], sizes = [8, 32], strides = [1, 1]} : vector<8x128xf32> to vector<8x32xf32>
    %33 = vector.extract_strided_slice %8 {offsets = [0, 64], sizes = [8, 32], strides = [1, 1]} : vector<8x128xf32> to vector<8x32xf32>
    %cst_23 = arith.constant dense<0.000000e+00> : vector<8x8xf32>
    %34 = tpu.matmul %31, %32, %cst_23 {dimension_numbers = #tpu.dot_dimension_numbers<[1], [1], [0], [0], [0, 0, 1, 0], [], []>} : vector<8x32xf32>, vector<8x32xf32>, vector<8x8xf32> -> vector<8x8xf32>
    %c2 = arith.constant 2 : index
    %c0_24 = arith.constant 0 : index
    %c0_25 = arith.constant 0 : index
    %35 = vector.load %arg7[%c2, %c0_24, %c0_25] : memref<4x8x32xf32, #tpu.memory_space<vmem>>, vector<1x8x32xf32>
    %36 = vector.shape_cast %35 : vector<1x8x32xf32> to vector<8x32xf32>
    %cst_26 = arith.constant dense<0.000000e+00> : vector<8x32xf32>
    %37 = tpu.matmul %34, %33, %cst_26 {dimension_numbers = #tpu.dot_dimension_numbers<[1], [0], [0], [1], [0, 0, 1, 1], [], []>} : vector<8x8xf32>, vector<8x32xf32>, vector<8x32xf32> -> vector<8x32xf32>
    %38 = arith.addf %36, %37 : vector<8x32xf32>
    %c2_27 = arith.constant 2 : index
    %c0_28 = arith.constant 0 : index
    %c0_29 = arith.constant 0 : index
    %39 = vector.load %arg7[%c2_27, %c0_28, %c0_29] : memref<4x8x32xf32, #tpu.memory_space<vmem>>, vector<1x8x32xf32>
    %40 = vector.shape_cast %39 : vector<1x8x32xf32> to vector<8x32xf32>
    %41 = vector.shape_cast %38 : vector<8x32xf32> to vector<1x8x32xf32>
    tpu.vector_store %arg7[%c2_27, %c0_28, %c0_29], %41 {strides = array<i32>} : memref<4x8x32xf32, #tpu.memory_space<vmem>>, vector<1x8x32xf32>,
    %42 = vector.extract_strided_slice %4 {offsets = [0, 96], sizes = [8, 32], strides = [1, 1]} : vector<8x128xf32> to vector<8x32xf32>
    %43 = vector.extract_strided_slice %6 {offsets = [0, 96], sizes = [8, 32], strides = [1, 1]} : vector<8x128xf32> to vector<8x32xf32>
    %44 = vector.extract_strided_slice %8 {offsets = [0, 96], sizes = [8, 32], strides = [1, 1]} : vector<8x128xf32> to vector<8x32xf32>
    %cst_30 = arith.constant dense<0.000000e+00> : vector<8x8xf32>
    %45 = tpu.matmul %42, %43, %cst_30 {dimension_numbers = #tpu.dot_dimension_numbers<[1], [1], [0], [0], [0, 0, 1, 0], [], []>} : vector<8x32xf32>, vector<8x32xf32>, vector<8x8xf32> -> vector<8x8xf32>
    %c3 = arith.constant 3 : index
    %c0_31 = arith.constant 0 : index
    %c0_32 = arith.constant 0 : index
    %46 = vector.load %arg7[%c3, %c0_31, %c0_32] : memref<4x8x32xf32, #tpu.memory_space<vmem>>, vector<1x8x32xf32>
    %47 = vector.shape_cast %46 : vector<1x8x32xf32> to vector<8x32xf32>
    %cst_33 = arith.constant dense<0.000000e+00> : vector<8x32xf32>
    %48 = tpu.matmul %45, %44, %cst_33 {dimension_numbers = #tpu.dot_dimension_numbers<[1], [0], [0], [1], [0, 0, 1, 1], [], []>} : vector<8x8xf32>, vector<8x32xf32>, vector<8x32xf32> -> vector<8x32xf32>
    %49 = arith.addf %47, %48 : vector<8x32xf32>
    %c3_34 = arith.constant 3 : index
    %c0_35 = arith.constant 0 : index
    %c0_36 = arith.constant 0 : index
    %50 = vector.load %arg7[%c3_34, %c0_35, %c0_36] : memref<4x8x32xf32, #tpu.memory_space<vmem>>, vector<1x8x32xf32>
    %51 = vector.shape_cast %50 : vector<1x8x32xf32> to vector<8x32xf32>
    %52 = vector.shape_cast %49 : vector<8x32xf32> to vector<1x8x32xf32>
    tpu.vector_store %arg7[%c3_34, %c0_35, %c0_36], %52 {strides = array<i32>} : memref<4x8x32xf32, #tpu.memory_space<vmem>>, vector<1x8x32xf32>,
    %c0_i32_37 = arith.constant 0 : i32
    %53 = arith.cmpi eq, %arg2, %c0_i32_37 : i32
    %54 = arith.extui %53 : i1 to i32
    %c0_i32_38 = arith.constant 0 : i32
    %55 = arith.cmpi ne, %54, %c0_i32_38 : i32
    scf.if %55 {
      %c0_39 = arith.constant 0 : index
      %c0_40 = arith.constant 0 : index
      %c0_41 = arith.constant 0 : index
      %56 = vector.load %arg7[%c0_39, %c0_40, %c0_41] : memref<4x8x32xf32, #tpu.memory_space<vmem>>, vector<1x8x32xf32>
      %57 = vector.shape_cast %56 : vector<1x8x32xf32> to vector<8x32xf32>
      %c0_42 = arith.constant 0 : index
      %c0_43 = arith.constant 0 : index
      %c0_44 = arith.constant 0 : index
      %58 = vector.load %arg6[%c0_42, %c0_43, %c0_44] : memref<1x8x128xf32, #tpu.memory_space<vmem>>, vector<1x8x32xf32>
      %59 = vector.shape_cast %58 : vector<1x8x32xf32> to vector<8x32xf32>
      %60 = vector.shape_cast %57 : vector<8x32xf32> to vector<1x8x32xf32>
      tpu.vector_store %arg6[%c0_42, %c0_43, %c0_44], %60 {strides = array<i32>} : memref<1x8x128xf32, #tpu.memory_space<vmem>>, vector<1x8x32xf32>,
      %c1_45 = arith.constant 1 : index
      %c0_46 = arith.constant 0 : index
      %c0_47 = arith.constant 0 : index
      %61 = vector.load %arg7[%c1_45, %c0_46, %c0_47] : memref<4x8x32xf32, #tpu.memory_space<vmem>>, vector<1x8x32xf32>
      %62 = vector.shape_cast %61 : vector<1x8x32xf32> to vector<8x32xf32>
      %c0_48 = arith.constant 0 : index
      %c0_49 = arith.constant 0 : index
      %c32 = arith.constant 32 : index
      %63 = vector.load %arg6[%c0_48, %c0_49, %c32] : memref<1x8x128xf32, #tpu.memory_space<vmem>>, vector<1x8x32xf32>
      %64 = vector.shape_cast %63 : vector<1x8x32xf32> to vector<8x32xf32>
      %65 = vector.shape_cast %62 : vector<8x32xf32> to vector<1x8x32xf32>
      tpu.vector_store %arg6[%c0_48, %c0_49, %c32], %65 {strides = array<i32>} : memref<1x8x128xf32, #tpu.memory_space<vmem>>, vector<1x8x32xf32>,
      %c2_50 = arith.constant 2 : index
      %c0_51 = arith.constant 0 : index
      %c0_52 = arith.constant 0 : index
      %66 = vector.load %arg7[%c2_50, %c0_51, %c0_52] : memref<4x8x32xf32, #tpu.memory_space<vmem>>, vector<1x8x32xf32>
      %67 = vector.shape_cast %66 : vector<1x8x32xf32> to vector<8x32xf32>
      %c0_53 = arith.constant 0 : index
      %c0_54 = arith.constant 0 : index
      %c64 = arith.constant 64 : index
      %68 = vector.load %arg6[%c0_53, %c0_54, %c64] : memref<1x8x128xf32, #tpu.memory_space<vmem>>, vector<1x8x32xf32>
      %69 = vector.shape_cast %68 : vector<1x8x32xf32> to vector<8x32xf32>
      %70 = vector.shape_cast %67 : vector<8x32xf32> to vector<1x8x32xf32>
      tpu.vector_store %arg6[%c0_53, %c0_54, %c64], %70 {strides = array<i32>} : memref<1x8x128xf32, #tpu.memory_space<vmem>>, vector<1x8x32xf32>,
      %c3_55 = arith.constant 3 : index
      %c0_56 = arith.constant 0 : index
      %c0_57 = arith.constant 0 : index
      %71 = vector.load %arg7[%c3_55, %c0_56, %c0_57] : memref<4x8x32xf32, #tpu.memory_space<vmem>>, vector<1x8x32xf32>
      %72 = vector.shape_cast %71 : vector<1x8x32xf32> to vector<8x32xf32>
      %c0_58 = arith.constant 0 : index
      %c0_59 = arith.constant 0 : index
      %c96 = arith.constant 96 : index
      %73 = vector.load %arg6[%c0_58, %c0_59, %c96] : memref<1x8x128xf32, #tpu.memory_space<vmem>>, vector<1x8x32xf32>
      %74 = vector.shape_cast %73 : vector<1x8x32xf32> to vector<8x32xf32>
      %75 = vector.shape_cast %72 : vector<8x32xf32> to vector<1x8x32xf32>
      tpu.vector_store %arg6[%c0_58, %c0_59, %c96], %75 {strides = array<i32>} : memref<1x8x128xf32, #tpu.memory_space<vmem>>, vector<1x8x32xf32>,
    } else {
    }
    return
  }
  func.func @transform_0(%arg0: i32, %arg1: i32, %arg2: i32) -> (i32, i32, i32) {
    %c0_i32 = arith.constant 0 : i32
    %c0_i32_0 = arith.constant 0 : i32
    return %arg0, %arg1, %c0_i32 : i32, i32, i32
  }
  func.func @transform_1(%arg0: i32, %arg1: i32, %arg2: i32) -> (i32, i32, i32) {
    %c0_i32 = arith.constant 0 : i32
    %c0_i32_0 = arith.constant 0 : i32
    return %arg0, %arg2, %c0_i32 : i32, i32, i32
  }
  func.func @transform_2(%arg0: i32, %arg1: i32, %arg2: i32) -> (i32, i32, i32) {
    %c0_i32 = arith.constant 0 : i32
    %c0_i32_0 = arith.constant 0 : i32
    return %arg0, %arg2, %c0_i32 : i32, i32, i32
  }
  func.func @transform_3(%arg0: i32, %arg1: i32, %arg2: i32) -> (i32, i32, i32) {
    %c0_i32 = arith.constant 0 : i32
    %c0_i32_0 = arith.constant 0 : i32
    return %arg0, %arg1, %c0_i32 : i32, i32, i32
  }
}

</mosaic_0001>

<llo_original>
// kernel: tpu_custom_call.1
$region0: #{tpu_custom_call.1}
  #allocation0 [shape = 'u32[]', space=smem, size = 0x4, offset = 0x4, fixed_abs, tag = 'smem constant byte address 0x4 - core index']
  #allocation1 [shape = 'u32[144,128]{1,0:T(1,128)}', space=vmem, size = 0x12000, scoped, tag = 'internal scratch']
  #allocation2 [shape = 'f32[4,8,32]{2,1,0:T(8,128)}', space=vmem, size = 0x4000, scoped, tag = 'scratch operand']
  %s0 = inlined_call_operand.hbm [shape: f32[2,8,128], index: 0, kind: input, shape index: {}]
  %s1 = inlined_call_operand.hbm [shape: f32[2,8,128], index: 1, kind: input, shape index: {}]
  %s2 = inlined_call_operand.hbm [shape: f32[2,8,128], index: 2, kind: input, shape index: {}]
  %s3 = inlined_call_operand.hbm [shape: f32[2,8,128], index: 3, kind: output, shape index: {}]
  %s4 = sld [smem:[#allocation0]]
  $region65: #{tpu_custom_call.1} parent=0
    _
  %s6 = ssub.s32 1, %s4
  %s7 = scalar_select 0, %s6, %s4
  $region1: #{tpu_custom_call.1} parent=0
    #allocation3 [shape = 'u8[8192]{0}', space=vmem, size = 0x2000, scoped, tag = 'input window, operand 0']
    #allocation4 [shape = 's32[2]{0}', space=sflag, size = 0x8, scoped, tag = 'scoped memory for tpu_custom_call.1']
    #allocation5 [shape = 's32[2]{0}', space=sflag, size = 0x8, scoped, tag = 'scoped memory for tpu_custom_call.1']
    #allocation6 [shape = 'u8[8192]{0}', space=vmem, size = 0x2000, scoped, tag = 'input window, operand 1']
    #allocation7 [shape = 's32[2]{0}', space=sflag, size = 0x8, scoped, tag = 'scoped memory for tpu_custom_call.1']
    #allocation8 [shape = 'u8[8192]{0}', space=vmem, size = 0x2000, scoped, tag = 'input window, operand 2']
    #allocation9 [shape = 'u8[8192]{0}', space=vmem, size = 0x2000, scoped, tag = 'output window, operand 0']
    %8 = vsyncpa [#allocation4], 0
    %s9 = scalar_lea.sflag [#allocation4], 1
    %10 = vsyncpa %s9, 0
    %11 = vsyncpa [#allocation7], 0
    %s12 = scalar_lea.sflag [#allocation7], 1
    %13 = vsyncpa %s12, 0
    %14 = vsyncpa [#allocation5], 0
    %s15 = scalar_lea.sflag [#allocation5], 1
    %16 = vsyncpa %s15, 0
    loop: start=0, step=1, limit=4
    $region2: #{tpu_custom_call.1} parent=1 // loop_pre_header
      _
    $region3: #{tpu_custom_call.1} parent=1 // loop_header
      %s18 = sphi 0, %s22
      %p19 = scmp.ge.s32.totalorder %s18, 4
      %s25 = sphi 0, %s44
      %s26 = sphi 0, %s40
      %s27 = sphi 0, %s36
      %s28 = sphi 0, %s25
      %s29 = sphi 0, %s26
      %s30 = sphi 0, %s27
      %s31 = sphi 0, %s28
      %s32 = sphi 0, %s29
      %s33 = sphi 0, %s30
      %s49 = sphi 0, %s51
      %s52 = sphi 0, %s49
      %s53 = sphi 0, %s52
      %s69 = sphi 0, %s53
      %s77 = sphi 0, %s79
      %s80 = sphi 0, %s77
      %s81 = sphi 0, %s80
      %s97 = sphi 0, %s81
      %s105 = sphi 0, %s107
      %s108 = sphi 0, %s105
      %s109 = sphi 0, %s108
      %s125 = sphi 0, %s109
      %s133 = sphi 0, %s135
      %s136 = sphi 0, %s133
      %s137 = sphi 0, %s136
      %s153 = sphi 0, %s137
    $region4: #{tpu_custom_call.1} parent=1 // loop_header_branch
      %21 = sbr.rel (%p19) target = $region8
    $region5: #{tpu_custom_call.1} parent=1 // loop_body
      %s23 = ssub.s32 %s18, 1
      %s24 = ssub.s32 %s18, 2
      %s34 = sadd.s32 1, %s27
      %p35 = scmp.ge.s32.totalorder %s34, 1
      %s36 = scalar_select %p35, 0, %s34
      %s37 = sadd.s32 1, %s26
      %s38 = scalar_select %p35, %s37, %s26
      %p39 = scmp.ge.s32.totalorder %s38, 1
      %s40 = scalar_select %p39, 0, %s38
      %s41 = sadd.s32 1, %s25
      %s42 = scalar_select %p39, %s41, %s25
      %p43 = scmp.ge.s32.totalorder %s42, 2
      %s44 = scalar_select %p43, 0, %s42
      %s45 = ssub.s32 %s25, %s44
      %s46 = ssub.s32 %s26, %s40
      %s47 = sor.u32 %s45, %s46
      %p48 = scmp.eq.s32.totalorder %s47, 0
      %s50 = sadd.s32 %s49, 1
      %s51 = scalar_select %p48, %s49, %s50
      %p54 = pneg %p48
      %p55 = scmp.eq.s32.totalorder %s18, 1
      %p56 = por %p54, %p55
      %p57 = scmp.ne.s32.totalorder %s49, %s52
      %p58 = scmp.eq.s32.totalorder %s18, 0
      %p59 = por %p57, %p58
      %p60 = scmp.ne.s32.totalorder %s49, %s52
      %p61 = scmp.eq.s32.totalorder %s23, 1
      %p62 = por %p60, %p61
      %p63 = scmp.ne.s32.totalorder %s52, %s53
      %p64 = scmp.eq.s32.totalorder %s23, 0
      %p65 = por %p63, %p64
      %p66 = scmp.ne.s32.totalorder %s52, %s53
      %p67 = scmp.eq.s32.totalorder %s24, 1
      %p68 = por %p66, %p67
      %p70 = scmp.ne.s32.totalorder %s53, %s69
      %p71 = scmp.eq.s32.totalorder %s24, 0
      %p72 = por %p70, %p71
      %s73 = ssub.s32 %s25, %s44
      %s74 = ssub.s32 %s27, %s36
      %s75 = sor.u32 %s73, %s74
      %p76 = scmp.eq.s32.totalorder %s75, 0
      %s78 = sadd.s32 %s77, 1
      %s79 = scalar_select %p76, %s77, %s78
      %p82 = pneg %p76
      %p83 = scmp.eq.s32.totalorder %s18, 1
      %p84 = por %p82, %p83
      %p85 = scmp.ne.s32.totalorder %s77, %s80
      %p86 = scmp.eq.s32.totalorder %s18, 0
      %p87 = por %p85, %p86
      %p88 = scmp.ne.s32.totalorder %s77, %s80
      %p89 = scmp.eq.s32.totalorder %s23, 1
      %p90 = por %p88, %p89
      %p91 = scmp.ne.s32.totalorder %s80, %s81
      %p92 = scmp.eq.s32.totalorder %s23, 0
      %p93 = por %p91, %p92
      %p94 = scmp.ne.s32.totalorder %s80, %s81
      %p95 = scmp.eq.s32.totalorder %s24, 1
      %p96 = por %p94, %p95
      %p98 = scmp.ne.s32.totalorder %s81, %s97
      %p99 = scmp.eq.s32.totalorder %s24, 0
      %p100 = por %p98, %p99
      %s101 = ssub.s32 %s25, %s44
      %s102 = ssub.s32 %s27, %s36
      %s103 = sor.u32 %s101, %s102
      %p104 = scmp.eq.s32.totalorder %s103, 0
      %s106 = sadd.s32 %s105, 1
      %s107 = scalar_select %p104, %s105, %s106
      %p110 = pneg %p104
      %p111 = scmp.eq.s32.totalorder %s18, 1
      %p112 = por %p110, %p111
      %p113 = scmp.ne.s32.totalorder %s105, %s108
      %p114 = scmp.eq.s32.totalorder %s18, 0
      %p115 = por %p113, %p114
      %p116 = scmp.ne.s32.totalorder %s105, %s108
      %p117 = scmp.eq.s32.totalorder %s23, 1
      %p118 = por %p116, %p117
      %p119 = scmp.ne.s32.totalorder %s108, %s109
      %p120 = scmp.eq.s32.totalorder %s23, 0
      %p121 = por %p119, %p120
      %p122 = scmp.ne.s32.totalorder %s108, %s109
      %p123 = scmp.eq.s32.totalorder %s24, 1
      %p124 = por %p122, %p123
      %p126 = scmp.ne.s32.totalorder %s109, %s125
      %p127 = scmp.eq.s32.totalorder %s24, 0
      %p128 = por %p126, %p127
      %s129 = ssub.s32 %s25, %s44
      %s130 = ssub.s32 %s26, %s40
      %s131 = sor.u32 %s129, %s130
      %p132 = scmp.eq.s32.totalorder %s131, 0
      %s134 = sadd.s32 %s133, 1
      %s135 = scalar_select %p132, %s133, %s134
      %p138 = pneg %p132
      %p139 = scmp.eq.s32.totalorder %s18, 1
      %p140 = por %p138, %p139
      %p141 = scmp.ne.s32.totalorder %s133, %s136
      %p142 = scmp.eq.s32.totalorder %s18, 0
      %p143 = por %p141, %p142
      %p144 = scmp.ne.s32.totalorder %s133, %s136
      %p145 = scmp.eq.s32.totalorder %s23, 1
      %p146 = por %p144, %p145
      %p147 = scmp.ne.s32.totalorder %s136, %s137
      %p148 = scmp.eq.s32.totalorder %s23, 0
      %p149 = por %p147, %p148
      %p150 = scmp.ne.s32.totalorder %s136, %s137
      %p151 = scmp.eq.s32.totalorder %s24, 1
      %p152 = por %p150, %p151
      %p154 = scmp.ne.s32.totalorder %s137, %s153
      %p155 = scmp.eq.s32.totalorder %s24, 0
      %p156 = por %p154, %p155
      %p157 = scmp.le.s32.totalorder 1, %s18
      %p158 = scmp.lt.s32.totalorder %s18, 3
      %p159 = pnand %p157, %p158
      %p160 = pneg %p159
      // Predicated region
      $region9: #{tpu_custom_call.1} parent=5 // pred_check
        _
      $region10: #{tpu_custom_call.1} parent=5 // pred_check_branch
        %162 = sbr.rel (%p159) target = $region12
      $region11: #{tpu_custom_call.1} parent=5 // pred_region
        %s163 = ssub.s32 %s18, 1
      $region12: #{tpu_custom_call.1} parent=5 // pred_fallthru
        _
      %p164 = scmp.lt.s32.totalorder %s18, 2
      // Predicated region
      $region13: #{tpu_custom_call.1} parent=5 // pred_check
        %p165 = pneg %p164
      $region14: #{tpu_custom_call.1} parent=5 // pred_check_branch
        %167 = sbr.rel (%p165) target = $region16
      $region15: #{tpu_custom_call.1} parent=5 // pred_region
        // Predicated region
        $region17: #{tpu_custom_call.1} parent=15 // pred_check
          %p168 = pneg %p59
        $region18: #{tpu_custom_call.1} parent=15 // pred_check_branch
          %170 = sbr.rel (%p168) target = $region20
        $region19: #{tpu_custom_call.1} parent=15 // pred_region
          %s171 = sand.u32 %s49, 1
          %s172 = scalar_lea.sflag [#allocation4], %s171
          %s173 = sand.u32 %s49, 1
          %s174 = smul.addr %s173, 8
          %s175 = scalar_lea.vmem [#allocation3], %s174
          %s177 = ssub.s32 128, 128
          %178 = vsyncadd %s172, %s177
          %s179 = sadd.s32 %s26, %s25
          %s180 = smul.addr %s179, 128
          %s181 = scalar_lea.hbm %s0, %s180
          %s183 = sshll.u32 %s175, 4
          %s184 = int_to_ptr.vmem [resolvable:$true] %s183
          %186 = dma.hbm_to_vmem [thread:$0]  %s181, 128, %s184, %s172
        $region20: #{tpu_custom_call.1} parent=15 // pred_fallthru
          _
        // Predicated region
        $region21: #{tpu_custom_call.1} parent=15 // pred_check
          %p187 = pneg %p87
        $region22: #{tpu_custom_call.1} parent=15 // pred_check_branch
          %189 = sbr.rel (%p187) target = $region24
        $region23: #{tpu_custom_call.1} parent=15 // pred_region
          %s190 = sand.u32 %s18, 1
          %s191 = scalar_lea.sflag [#allocation7], %s190
          %s192 = sand.u32 %s77, 1
          %s193 = smul.addr %s192, 8
          %s194 = scalar_lea.vmem [#allocation6], %s193
          %s196 = ssub.s32 128, 128
          %197 = vsyncadd %s191, %s196
          %s198 = sadd.s32 %s27, %s25
          %s199 = smul.addr %s198, 128
          %s200 = scalar_lea.hbm %s1, %s199
          %s202 = sshll.u32 %s194, 4
          %s203 = int_to_ptr.vmem [resolvable:$true] %s202
          %205 = dma.hbm_to_vmem [thread:$0]  %s200, 128, %s203, %s191
        $region24: #{tpu_custom_call.1} parent=15 // pred_fallthru
          _
        // Predicated region
        $region25: #{tpu_custom_call.1} parent=15 // pred_check
          %p206 = pneg %p115
        $region26: #{tpu_custom_call.1} parent=15 // pred_check_branch
          %208 = sbr.rel (%p206) target = $region28
        $region27: #{tpu_custom_call.1} parent=15 // pred_region
          %s209 = sand.u32 %s18, 1
          %s210 = scalar_lea.sflag [#allocation7], %s209
          %s211 = sand.u32 %s105, 1
          %s212 = smul.addr %s211, 8
          %s213 = scalar_lea.vmem [#allocation8], %s212
          %s215 = ssub.s32 128, 128
          %216 = vsyncadd %s210, %s215
          %s217 = sadd.s32 %s27, %s25
          %s218 = smul.addr %s217, 128
          %s219 = scalar_lea.hbm %s2, %s218
          %s221 = sshll.u32 %s213, 4
          %s222 = int_to_ptr.vmem [resolvable:$true] %s221
          %224 = dma.hbm_to_vmem [thread:$0]  %s219, 128, %s222, %s210
        $region28: #{tpu_custom_call.1} parent=15 // pred_fallthru
          _
      $region16: #{tpu_custom_call.1} parent=5 // pred_fallthru
        _
      %p225 = scmp.le.s32.totalorder 1, %s18
      %p226 = scmp.lt.s32.totalorder %s18, 3
      %p227 = pnand %p225, %p226
      %p228 = pneg %p227
      // Predicated region
      $region29: #{tpu_custom_call.1} parent=5 // pred_check
        _
      $region30: #{tpu_custom_call.1} parent=5 // pred_check_branch
        %230 = sbr.rel (%p227) target = $region32
      $region31: #{tpu_custom_call.1} parent=5 // pred_region
        %s231 = ssub.s32 %s18, 1
        %s232 = sand.u32 %s52, 1
        %s233 = scalar_lea.sflag [#allocation4], %s232
        %s234 = sand.u32 %s52, 1
        %s235 = smul.addr %s234, 8
        %s236 = scalar_lea.vmem [#allocation3], %s235
        // Predicated region
        $region33: #{tpu_custom_call.1} parent=31 // pred_check
          %p237 = pneg %p65
        $region34: #{tpu_custom_call.1} parent=31 // pred_check_branch
          %239 = sbr.rel (%p237) target = $region36
        $region35: #{tpu_custom_call.1} parent=31 // pred_region
          %240 = dma.done %s233, 128
        $region36: #{tpu_custom_call.1} parent=31 // pred_fallthru
          _
        %s241 = sand.u32 %s23, 1
        %s242 = scalar_lea.sflag [#allocation7], %s241
        %s243 = sand.u32 %s80, 1
        %s244 = smul.addr %s243, 8
        %s245 = scalar_lea.vmem [#allocation6], %s244
        // Predicated region
        $region37: #{tpu_custom_call.1} parent=31 // pred_check
          %p246 = pneg %p93
        $region38: #{tpu_custom_call.1} parent=31 // pred_check_branch
          %248 = sbr.rel (%p246) target = $region40
        $region39: #{tpu_custom_call.1} parent=31 // pred_region
          %249 = dma.done %s242, 128
        $region40: #{tpu_custom_call.1} parent=31 // pred_fallthru
          _
        %s250 = sand.u32 %s23, 1
        %s251 = scalar_lea.sflag [#allocation7], %s250
        %s252 = sand.u32 %s108, 1
        %s253 = smul.addr %s252, 8
        %s254 = scalar_lea.vmem [#allocation8], %s253
        // Predicated region
        $region41: #{tpu_custom_call.1} parent=31 // pred_check
          %p255 = pneg %p121
        $region42: #{tpu_custom_call.1} parent=31 // pred_check_branch
          %257 = sbr.rel (%p255) target = $region44
        $region43: #{tpu_custom_call.1} parent=31 // pred_region
          %258 = dma.done %s251, 128
        $region44: #{tpu_custom_call.1} parent=31 // pred_fallthru
          _
        %s259 = sand.u32 %s52, 1
        %s260 = scalar_lea.sflag [#allocation4], %s259
        %s261 = sand.u32 %s52, 1
        %s262 = smul.addr %s261, 8
        %s263 = scalar_lea.vmem [#allocation3], %s262
        %p264 = pneg %p65
        %p265 = pneg %p62
        %s266 = sand.u32 %s23, 1
        %s267 = scalar_lea.sflag [#allocation7], %s266
        %s268 = sand.u32 %s80, 1
        %s269 = smul.addr %s268, 8
        %s270 = scalar_lea.vmem [#allocation6], %s269
        %p271 = pneg %p93
        %p272 = pneg %p90
        %s273 = sand.u32 %s23, 1
        %s274 = scalar_lea.sflag [#allocation7], %s273
        %s275 = sand.u32 %s108, 1
        %s276 = smul.addr %s275, 8
        %s277 = scalar_lea.vmem [#allocation8], %s276
        %p278 = pneg %p121
        %p279 = pneg %p118
        %p280 = pneg %p149
        %p281 = pneg %p146
        %s282 = sand.u32 %s136, 1
        %s283 = scalar_lea.sflag [#allocation5], %s282
        %s284 = sand.u32 %s136, 1
        %s285 = smul.addr %s284, 8
        %s286 = scalar_lea.vmem [#allocation9], %s285
        %p287 = scmp.eq.s32.totalorder %s30, 0
        // Predicated region
        $region45: #{tpu_custom_call.1} parent=31 // pred_check
          %p288 = pneg %p287
        $region46: #{tpu_custom_call.1} parent=31 // pred_check_branch
          %290 = sbr.rel (%p288) target = $region48
        $region47: #{tpu_custom_call.1} parent=31 // pred_region
          %vm291 = vcmask 261120
          %292 = vst.msk [vmem:[#allocation2] sm:$0xff] %vm291, 0.0
          %293 = vst.msk [vmem:[#allocation2 + $0x8] sm:$0xff] %vm291, 0.0
          %294 = vst.msk [vmem:[#allocation2 + $0x10] sm:$0xff] %vm291, 0.0
          %295 = vst.msk [vmem:[#allocation2 + $0x18] sm:$0xff] %vm291, 0.0
        $region48: #{tpu_custom_call.1} parent=31 // pred_fallthru
          _
        %v296 = vld [vmem:[%s236] sm:$0xff]
        %v297 = vld [vmem:[%s245] sm:$0xff]
        %v298 = vld [vmem:[%s254] sm:$0xff]
        %vm299 = vcmask 261120
        %v301 = vsel %vm299, %v296, 0
        %v304 = vsel %vm299, %v297, 0
        %306 = vmatprep.subr.mxu0 0.0
        %307 = vmatpush1.xpose.msra.mxu0 %v304
        %308 = vmatprep.subr.mxu0 0.0
        %309 = vmatpush1.xpose.msra.mxu0 0.0
        %310 = vmatprep.subr.mxu0 0.0
        %311 = vmatpush1.xpose.msra.mxu0 0.0
        %312 = vmatprep.subr.mxu0 0.0
        %313 = vmatpush1.xpose.msra.mxu0 0.0
        %314 = vmatprep.subr.mxu0 0.0
        %315 = vmatpush1.xpose.msra.mxu0 0.0
        %316 = vmatprep.subr.mxu0 0.0
        %317 = vmatpush1.xpose.msra.mxu0 0.0
        %318 = vmatprep.subr.mxu0 0.0
        %319 = vmatpush1.xpose.msra.mxu0 0.0
        %320 = vmatprep.subr.mxu0 0.0
        %321 = vmatpush1.xpose.msra.mxu0 0.0
        %322 = vmatprep.subr.mxu0 0.0
        %323 = vmatpush1.xpose.msra.mxu0 0.0
        %324 = vmatprep.subr.mxu0 0.0
        %325 = vmatpush1.xpose.msra.mxu0 0.0
        %326 = vmatprep.subr.mxu0 0.0
        %327 = vmatpush1.xpose.msra.mxu0 0.0
        %328 = vmatprep.subr.mxu0 0.0
        %329 = vmatpush1.xpose.msra.mxu0 0.0
        %330 = vmatprep.subr.mxu0 0.0
        %331 = vmatpush1.xpose.msra.mxu0 0.0
        %332 = vmatprep.subr.mxu0 0.0
        %333 = vmatpush1.xpose.msra.mxu0 0.0
        %334 = vmatprep.subr.mxu0 0.0
        %335 = vmatpush1.xpose.msra.mxu0 0.0
        %336 = vmatprep.subr.mxu0 0.0
        %337 = vmatpush1.xpose.msra.mxu0 0.0
        %338 = vmatprep.subr.mxu0 0.0
        %339 = vmatpush1.xpose.msra.mxu0 0.0
        %340 = vmatprep.subr.mxu0 0.0
        %341 = vmatpush1.xpose.msra.mxu0 0.0
        %342 = vmatprep.subr.mxu0 0.0
        %343 = vmatpush1.xpose.msra.mxu0 0.0
        %344 = vmatprep.subr.mxu0 0.0
        %345 = vmatpush1.xpose.msra.mxu0 0.0
        %346 = vmatprep.subr.mxu0 0.0
        %347 = vmatpush1.xpose.msra.mxu0 0.0
        %348 = vmatprep.subr.mxu0 0.0
        %349 = vmatpush1.xpose.msra.mxu0 0.0
        %350 = vmatprep.subr.mxu0 0.0
        %351 = vmatpush1.xpose.msra.mxu0 0.0
        %352 = vmatprep.subr.mxu0 0.0
        %353 = vmatpush1.xpose.msra.mxu0 0.0
        %354 = vmatprep.subr.mxu0 0.0
        %355 = vmatpush1.xpose.msra.mxu0 0.0
        %356 = vmatprep.subr.mxu0 0.0
        %357 = vmatpush1.xpose.msra.mxu0 0.0
        %358 = vmatprep.subr.mxu0 0.0
        %359 = vmatpush1.xpose.msra.mxu0 0.0
        %360 = vmatprep.subr.mxu0 0.0
        %361 = vmatpush1.xpose.msra.mxu0 0.0
        %362 = vmatprep.subr.mxu0 0.0
        %363 = vmatpush1.xpose.msra.mxu0 0.0
        %364 = vmatprep.subr.mxu0 0.0
        %365 = vmatpush1.xpose.msra.mxu0 0.0
        %366 = vmatprep.subr.mxu0 0.0
        %367 = vmatpush1.xpose.msra.mxu0 0.0
        %368 = vmatprep.subr.mxu0 0.0
        %369 = vmatpush1.xpose.msra.mxu0 0.0
        %370 = vmatprep.mubr.f32.mxu0 0.0
        %371 = vmatmul.mubr.f32.gmra.mrb[0].mxu0 %v301
        %v372 = vpop.f32.mrb[0].mxu0
        %v373 = vadd.f32 0.0, %v372
        %v374 = vpop.f32.mrb[0].mxu0
        %375 = vdwg.mxu0
        %v376 = vld [vmem:[#allocation2] sm:$0xff]
        %vm377 = vcmask 64512
        %v379 = vsel %vm377, %v373, 0
        %381 = vmatprep.subr.mxu0 0.0
        %382 = vmatpush1.msra.mxu0 %v298
        %383 = vmatprep.subr.mxu0 0.0
        %384 = vmatpush1.msra.mxu0 0.0
        %385 = vmatprep.subr.mxu0 0.0
        %386 = vmatpush1.msra.mxu0 0.0
        %387 = vmatprep.subr.mxu0 0.0
        %388 = vmatpush1.msra.mxu0 0.0
        %389 = vmatprep.subr.mxu0 0.0
        %390 = vmatpush1.msra.mxu0 0.0
        %391 = vmatprep.subr.mxu0 0.0
        %392 = vmatpush1.msra.mxu0 0.0
        %393 = vmatprep.subr.mxu0 0.0
        %394 = vmatpush1.msra.mxu0 0.0
        %395 = vmatprep.subr.mxu0 0.0
        %396 = vmatpush1.msra.mxu0 0.0
        %397 = vmatprep.subr.mxu0 0.0
        %398 = vmatpush1.msra.mxu0 0.0
        %399 = vmatprep.subr.mxu0 0.0
        %400 = vmatpush1.msra.mxu0 0.0
        %401 = vmatprep.subr.mxu0 0.0
        %402 = vmatpush1.msra.mxu0 0.0
        %403 = vmatprep.subr.mxu0 0.0
        %404 = vmatpush1.msra.mxu0 0.0
        %405 = vmatprep.subr.mxu0 0.0
        %406 = vmatpush1.msra.mxu0 0.0
        %407 = vmatprep.subr.mxu0 0.0
        %408 = vmatpush1.msra.mxu0 0.0
        %409 = vmatprep.subr.mxu0 0.0
        %410 = vmatpush1.msra.mxu0 0.0
        %411 = vmatprep.subr.mxu0 0.0
        %412 = vmatpush1.msra.mxu0 0.0
        %413 = vmatprep.subr.mxu0 0.0
        %414 = vmatpush1.msra.mxu0 0.0
        %415 = vmatprep.subr.mxu0 0.0
        %416 = vmatpush1.msra.mxu0 0.0
        %417 = vmatprep.subr.mxu0 0.0
        %418 = vmatpush1.msra.mxu0 0.0
        %419 = vmatprep.subr.mxu0 0.0
        %420 = vmatpush1.msra.mxu0 0.0
        %421 = vmatprep.subr.mxu0 0.0
        %422 = vmatpush1.msra.mxu0 0.0
        %423 = vmatprep.subr.mxu0 0.0
        %424 = vmatpush1.msra.mxu0 0.0
        %425 = vmatprep.subr.mxu0 0.0
        %426 = vmatpush1.msra.mxu0 0.0
        %427 = vmatprep.subr.mxu0 0.0
        %428 = vmatpush1.msra.mxu0 0.0
        %429 = vmatprep.subr.mxu0 0.0
        %430 = vmatpush1.msra.mxu0 0.0
        %431 = vmatprep.subr.mxu0 0.0
        %432 = vmatpush1.msra.mxu0 0.0
        %433 = vmatprep.subr.mxu0 0.0
        %434 = vmatpush1.msra.mxu0 0.0
        %435 = vmatprep.subr.mxu0 0.0
        %436 = vmatpush1.msra.mxu0 0.0
        %437 = vmatprep.subr.mxu0 0.0
        %438 = vmatpush1.msra.mxu0 0.0
        %439 = vmatprep.subr.mxu0 0.0
        %440 = vmatpush1.msra.mxu0 0.0
        %441 = vmatprep.subr.mxu0 0.0
        %442 = vmatpush1.msra.mxu0 0.0
        %443 = vmatprep.subr.mxu0 0.0
        %444 = vmatpush1.msra.mxu0 0.0
        %445 = vmatprep.mubr.f32.mxu0 0.0
        %446 = vmatmul.mubr.f32.gmra.mrb[0].mxu0 %v379
        %v447 = vpop.f32.mrb[0].mxu0
        %v448 = vadd.f32 0.0, %v447
        %v449 = vpop.f32.mrb[0].mxu0
        %450 = vdwg.mxu0
        %v451 = vadd.f32 %v376, %v448
        %452 = vst.msk [vmem:[#allocation2] sm:$0xff] %vm299, %v451
        %453 = vrot.lane.b32.xlu0 %v296, 96
        %v454 = vpop.permute.xlu0 %453
        %455 = vrot.lane.b32.xlu0 %v297, 96
        %v456 = vpop.permute.xlu0 %455
        %v457 = vsel %vm299, %v454, 0
        %v459 = vsel %vm299, %v456, 0
        %461 = vmatprep.subr.mxu0 0.0
        %462 = vmatpush1.xpose.msra.mxu0 %v459
        %463 = vmatprep.subr.mxu0 0.0
        %464 = vmatpush1.xpose.msra.mxu0 0.0
        %465 = vmatprep.subr.mxu0 0.0
        %466 = vmatpush1.xpose.msra.mxu0 0.0
        %467 = vmatprep.subr.mxu0 0.0
        %468 = vmatpush1.xpose.msra.mxu0 0.0
        %469 = vmatprep.subr.mxu0 0.0
        %470 = vmatpush1.xpose.msra.mxu0 0.0
        %471 = vmatprep.subr.mxu0 0.0
        %472 = vmatpush1.xpose.msra.mxu0 0.0
        %473 = vmatprep.subr.mxu0 0.0
        %474 = vmatpush1.xpose.msra.mxu0 0.0
        %475 = vmatprep.subr.mxu0 0.0
        %476 = vmatpush1.xpose.msra.mxu0 0.0
        %477 = vmatprep.subr.mxu0 0.0
        %478 = vmatpush1.xpose.msra.mxu0 0.0
        %479 = vmatprep.subr.mxu0 0.0
        %480 = vmatpush1.xpose.msra.mxu0 0.0
        %481 = vmatprep.subr.mxu0 0.0
        %482 = vmatpush1.xpose.msra.mxu0 0.0
        %483 = vmatprep.subr.mxu0 0.0
        %484 = vmatpush1.xpose.msra.mxu0 0.0
        %485 = vmatprep.subr.mxu0 0.0
        %486 = vmatpush1.xpose.msra.mxu0 0.0
        %487 = vmatprep.subr.mxu0 0.0
        %488 = vmatpush1.xpose.msra.mxu0 0.0
        %489 = vmatprep.subr.mxu0 0.0
        %490 = vmatpush1.xpose.msra.mxu0 0.0
        %491 = vmatprep.subr.mxu0 0.0
        %492 = vmatpush1.xpose.msra.mxu0 0.0
        %493 = vmatprep.subr.mxu0 0.0
        %494 = vmatpush1.xpose.msra.mxu0 0.0
        %495 = vmatprep.subr.mxu0 0.0
        %496 = vmatpush1.xpose.msra.mxu0 0.0
        %497 = vmatprep.subr.mxu0 0.0
        %498 = vmatpush1.xpose.msra.mxu0 0.0
        %499 = vmatprep.subr.mxu0 0.0
        %500 = vmatpush1.xpose.msra.mxu0 0.0
        %501 = vmatprep.subr.mxu0 0.0
        %502 = vmatpush1.xpose.msra.mxu0 0.0
        %503 = vmatprep.subr.mxu0 0.0
        %504 = vmatpush1.xpose.msra.mxu0 0.0
        %505 = vmatprep.subr.mxu0 0.0
        %506 = vmatpush1.xpose.msra.mxu0 0.0
        %507 = vmatprep.subr.mxu0 0.0
        %508 = vmatpush1.xpose.msra.mxu0 0.0
        %509 = vmatprep.subr.mxu0 0.0
        %510 = vmatpush1.xpose.msra.mxu0 0.0
        %511 = vmatprep.subr.mxu0 0.0
        %512 = vmatpush1.xpose.msra.mxu0 0.0
        %513 = vmatprep.subr.mxu0 0.0
        %514 = vmatpush1.xpose.msra.mxu0 0.0
        %515 = vmatprep.subr.mxu0 0.0
        %516 = vmatpush1.xpose.msra.mxu0 0.0
        %517 = vmatprep.subr.mxu0 0.0
        %518 = vmatpush1.xpose.msra.mxu0 0.0
        %519 = vmatprep.subr.mxu0 0.0
        %520 = vmatpush1.xpose.msra.mxu0 0.0
        %521 = vmatprep.subr.mxu0 0.0
        %522 = vmatpush1.xpose.msra.mxu0 0.0
        %523 = vmatprep.subr.mxu0 0.0
        %524 = vmatpush1.xpose.msra.mxu0 0.0
        %525 = vmatprep.mubr.f32.mxu0 0.0
        %526 = vmatmul.mubr.f32.gmra.mrb[0].mxu0 %v457
        %v527 = vpop.f32.mrb[0].mxu0
        %v528 = vadd.f32 0.0, %v527
        %v529 = vpop.f32.mrb[0].mxu0
        %530 = vdwg.mxu0
        %s531 = scalar_lea.vmem [#allocation2], 8
        %v532 = vld [vmem:[%s531] sm:$0xff]
        %534 = vrot.lane.b32.xlu0 %v298, 96
        %v535 = vpop.permute.xlu0 %534
        %v538 = vsel %vm377, %v528, 0
        %540 = vmatprep.subr.mxu0 0.0
        %541 = vmatpush1.msra.mxu0 %v535
        %542 = vmatprep.subr.mxu0 0.0
        %543 = vmatpush1.msra.mxu0 0.0
        %544 = vmatprep.subr.mxu0 0.0
        %545 = vmatpush1.msra.mxu0 0.0
        %546 = vmatprep.subr.mxu0 0.0
        %547 = vmatpush1.msra.mxu0 0.0
        %548 = vmatprep.subr.mxu0 0.0
        %549 = vmatpush1.msra.mxu0 0.0
        %550 = vmatprep.subr.mxu0 0.0
        %551 = vmatpush1.msra.mxu0 0.0
        %552 = vmatprep.subr.mxu0 0.0
        %553 = vmatpush1.msra.mxu0 0.0
        %554 = vmatprep.subr.mxu0 0.0
        %555 = vmatpush1.msra.mxu0 0.0
        %556 = vmatprep.subr.mxu0 0.0
        %557 = vmatpush1.msra.mxu0 0.0
        %558 = vmatprep.subr.mxu0 0.0
        %559 = vmatpush1.msra.mxu0 0.0
        %560 = vmatprep.subr.mxu0 0.0
        %561 = vmatpush1.msra.mxu0 0.0
        %562 = vmatprep.subr.mxu0 0.0
        %563 = vmatpush1.msra.mxu0 0.0
        %564 = vmatprep.subr.mxu0 0.0
        %565 = vmatpush1.msra.mxu0 0.0
        %566 = vmatprep.subr.mxu0 0.0
        %567 = vmatpush1.msra.mxu0 0.0
        %568 = vmatprep.subr.mxu0 0.0
        %569 = vmatpush1.msra.mxu0 0.0
        %570 = vmatprep.subr.mxu0 0.0
        %571 = vmatpush1.msra.mxu0 0.0
        %572 = vmatprep.subr.mxu0 0.0
        %573 = vmatpush1.msra.mxu0 0.0
        %574 = vmatprep.subr.mxu0 0.0
        %575 = vmatpush1.msra.mxu0 0.0
        %576 = vmatprep.subr.mxu0 0.0
        %577 = vmatpush1.msra.mxu0 0.0
        %578 = vmatprep.subr.mxu0 0.0
        %579 = vmatpush1.msra.mxu0 0.0
        %580 = vmatprep.subr.mxu0 0.0
        %581 = vmatpush1.msra.mxu0 0.0
        %582 = vmatprep.subr.mxu0 0.0
        %583 = vmatpush1.msra.mxu0 0.0
        %584 = vmatprep.subr.mxu0 0.0
        %585 = vmatpush1.msra.mxu0 0.0
        %586 = vmatprep.subr.mxu0 0.0
        %587 = vmatpush1.msra.mxu0 0.0
        %588 = vmatprep.subr.mxu0 0.0
        %589 = vmatpush1.msra.mxu0 0.0
        %590 = vmatprep.subr.mxu0 0.0
        %591 = vmatpush1.msra.mxu0 0.0
        %592 = vmatprep.subr.mxu0 0.0
        %593 = vmatpush1.msra.mxu0 0.0
        %594 = vmatprep.subr.mxu0 0.0
        %595 = vmatpush1.msra.mxu0 0.0
        %596 = vmatprep.subr.mxu0 0.0
        %597 = vmatpush1.msra.mxu0 0.0
        %598 = vmatprep.subr.mxu0 0.0
        %599 = vmatpush1.msra.mxu0 0.0
        %600 = vmatprep.subr.mxu0 0.0
        %601 = vmatpush1.msra.mxu0 0.0
        %602 = vmatprep.subr.mxu0 0.0
        %603 = vmatpush1.msra.mxu0 0.0
        %604 = vmatprep.mubr.f32.mxu0 0.0
        %605 = vmatmul.mubr.f32.gmra.mrb[0].mxu0 %v538
        %v606 = vpop.f32.mrb[0].mxu0
        %v607 = vadd.f32 0.0, %v606
        %v608 = vpop.f32.mrb[0].mxu0
        %609 = vdwg.mxu0
        %v610 = vadd.f32 %v532, %v607
        %611 = vst.msk [vmem:[%s531] sm:$0xff] %vm299, %v610
        %612 = vrot.lane.b32.xlu0 %v296, 64
        %v613 = vpop.permute.xlu0 %612
        %614 = vrot.lane.b32.xlu0 %v297, 64
        %v615 = vpop.permute.xlu0 %614
        %v616 = vsel %vm299, %v613, 0
        %v618 = vsel %vm299, %v615, 0
        %620 = vmatprep.subr.mxu0 0.0
        %621 = vmatpush1.xpose.msra.mxu0 %v618
        %622 = vmatprep.subr.mxu0 0.0
        %623 = vmatpush1.xpose.msra.mxu0 0.0
        %624 = vmatprep.subr.mxu0 0.0
        %625 = vmatpush1.xpose.msra.mxu0 0.0
        %626 = vmatprep.subr.mxu0 0.0
        %627 = vmatpush1.xpose.msra.mxu0 0.0
        %628 = vmatprep.subr.mxu0 0.0
        %629 = vmatpush1.xpose.msra.mxu0 0.0
        %630 = vmatprep.subr.mxu0 0.0
        %631 = vmatpush1.xpose.msra.mxu0 0.0
        %632 = vmatprep.subr.mxu0 0.0
        %633 = vmatpush1.xpose.msra.mxu0 0.0
        %634 = vmatprep.subr.mxu0 0.0
        %635 = vmatpush1.xpose.msra.mxu0 0.0
        %636 = vmatprep.subr.mxu0 0.0
        %637 = vmatpush1.xpose.msra.mxu0 0.0
        %638 = vmatprep.subr.mxu0 0.0
        %639 = vmatpush1.xpose.msra.mxu0 0.0
        %640 = vmatprep.subr.mxu0 0.0
        %641 = vmatpush1.xpose.msra.mxu0 0.0
        %642 = vmatprep.subr.mxu0 0.0
        %643 = vmatpush1.xpose.msra.mxu0 0.0
        %644 = vmatprep.subr.mxu0 0.0
        %645 = vmatpush1.xpose.msra.mxu0 0.0
        %646 = vmatprep.subr.mxu0 0.0
        %647 = vmatpush1.xpose.msra.mxu0 0.0
        %648 = vmatprep.subr.mxu0 0.0
        %649 = vmatpush1.xpose.msra.mxu0 0.0
        %650 = vmatprep.subr.mxu0 0.0
        %651 = vmatpush1.xpose.msra.mxu0 0.0
        %652 = vmatprep.subr.mxu0 0.0
        %653 = vmatpush1.xpose.msra.mxu0 0.0
        %654 = vmatprep.subr.mxu0 0.0
        %655 = vmatpush1.xpose.msra.mxu0 0.0
        %656 = vmatprep.subr.mxu0 0.0
        %657 = vmatpush1.xpose.msra.mxu0 0.0
        %658 = vmatprep.subr.mxu0 0.0
        %659 = vmatpush1.xpose.msra.mxu0 0.0
        %660 = vmatprep.subr.mxu0 0.0
        %661 = vmatpush1.xpose.msra.mxu0 0.0
        %662 = vmatprep.subr.mxu0 0.0
        %663 = vmatpush1.xpose.msra.mxu0 0.0
        %664 = vmatprep.subr.mxu0 0.0
        %665 = vmatpush1.xpose.msra.mxu0 0.0
        %666 = vmatprep.subr.mxu0 0.0
        %667 = vmatpush1.xpose.msra.mxu0 0.0
        %668 = vmatprep.subr.mxu0 0.0
        %669 = vmatpush1.xpose.msra.mxu0 0.0
        %670 = vmatprep.subr.mxu0 0.0
        %671 = vmatpush1.xpose.msra.mxu0 0.0
        %672 = vmatprep.subr.mxu0 0.0
        %673 = vmatpush1.xpose.msra.mxu0 0.0
        %674 = vmatprep.subr.mxu0 0.0
        %675 = vmatpush1.xpose.msra.mxu0 0.0
        %676 = vmatprep.subr.mxu0 0.0
        %677 = vmatpush1.xpose.msra.mxu0 0.0
        %678 = vmatprep.subr.mxu0 0.0
        %679 = vmatpush1.xpose.msra.mxu0 0.0
        %680 = vmatprep.subr.mxu0 0.0
        %681 = vmatpush1.xpose.msra.mxu0 0.0
        %682 = vmatprep.subr.mxu0 0.0
        %683 = vmatpush1.xpose.msra.mxu0 0.0
        %684 = vmatprep.mubr.f32.mxu0 0.0
        %685 = vmatmul.mubr.f32.gmra.mrb[0].mxu0 %v616
        %v686 = vpop.f32.mrb[0].mxu0
        %v687 = vadd.f32 0.0, %v686
        %v688 = vpop.f32.mrb[0].mxu0
        %689 = vdwg.mxu0
        %s690 = scalar_lea.vmem [#allocation2], 16
        %v691 = vld [vmem:[%s690] sm:$0xff]
        %692 = vrot.lane.b32.xlu0 %v298, 64
        %v693 = vpop.permute.xlu0 %692
        %v696 = vsel %vm377, %v687, 0
        %698 = vmatprep.subr.mxu0 0.0
        %699 = vmatpush1.msra.mxu0 %v693
        %700 = vmatprep.subr.mxu0 0.0
        %701 = vmatpush1.msra.mxu0 0.0
        %702 = vmatprep.subr.mxu0 0.0
        %703 = vmatpush1.msra.mxu0 0.0
        %704 = vmatprep.subr.mxu0 0.0
        %705 = vmatpush1.msra.mxu0 0.0
        %706 = vmatprep.subr.mxu0 0.0
        %707 = vmatpush1.msra.mxu0 0.0
        %708 = vmatprep.subr.mxu0 0.0
        %709 = vmatpush1.msra.mxu0 0.0
        %710 = vmatprep.subr.mxu0 0.0
        %711 = vmatpush1.msra.mxu0 0.0
        %712 = vmatprep.subr.mxu0 0.0
        %713 = vmatpush1.msra.mxu0 0.0
        %714 = vmatprep.subr.mxu0 0.0
        %715 = vmatpush1.msra.mxu0 0.0
        %716 = vmatprep.subr.mxu0 0.0
        %717 = vmatpush1.msra.mxu0 0.0
        %718 = vmatprep.subr.mxu0 0.0
        %719 = vmatpush1.msra.mxu0 0.0
        %720 = vmatprep.subr.mxu0 0.0
        %721 = vmatpush1.msra.mxu0 0.0
        %722 = vmatprep.subr.mxu0 0.0
        %723 = vmatpush1.msra.mxu0 0.0
        %724 = vmatprep.subr.mxu0 0.0
        %725 = vmatpush1.msra.mxu0 0.0
        %726 = vmatprep.subr.mxu0 0.0
        %727 = vmatpush1.msra.mxu0 0.0
        %728 = vmatprep.subr.mxu0 0.0
        %729 = vmatpush1.msra.mxu0 0.0
        %730 = vmatprep.subr.mxu0 0.0
        %731 = vmatpush1.msra.mxu0 0.0
        %732 = vmatprep.subr.mxu0 0.0
        %733 = vmatpush1.msra.mxu0 0.0
        %734 = vmatprep.subr.mxu0 0.0
        %735 = vmatpush1.msra.mxu0 0.0
        %736 = vmatprep.subr.mxu0 0.0
        %737 = vmatpush1.msra.mxu0 0.0
        %738 = vmatprep.subr.mxu0 0.0
        %739 = vmatpush1.msra.mxu0 0.0
        %740 = vmatprep.subr.mxu0 0.0
        %741 = vmatpush1.msra.mxu0 0.0
        %742 = vmatprep.subr.mxu0 0.0
        %743 = vmatpush1.msra.mxu0 0.0
        %744 = vmatprep.subr.mxu0 0.0
        %745 = vmatpush1.msra.mxu0 0.0
        %746 = vmatprep.subr.mxu0 0.0
        %747 = vmatpush1.msra.mxu0 0.0
        %748 = vmatprep.subr.mxu0 0.0
        %749 = vmatpush1.msra.mxu0 0.0
        %750 = vmatprep.subr.mxu0 0.0
        %751 = vmatpush1.msra.mxu0 0.0
        %752 = vmatprep.subr.mxu0 0.0
        %753 = vmatpush1.msra.mxu0 0.0
        %754 = vmatprep.subr.mxu0 0.0
        %755 = vmatpush1.msra.mxu0 0.0
        %756 = vmatprep.subr.mxu0 0.0
        %757 = vmatpush1.msra.mxu0 0.0
        %758 = vmatprep.subr.mxu0 0.0
        %759 = vmatpush1.msra.mxu0 0.0
        %760 = vmatprep.subr.mxu0 0.0
        %761 = vmatpush1.msra.mxu0 0.0
        %762 = vmatprep.mubr.f32.mxu0 0.0
        %763 = vmatmul.mubr.f32.gmra.mrb[0].mxu0 %v696
        %v764 = vpop.f32.mrb[0].mxu0
        %v765 = vadd.f32 0.0, %v764
        %v766 = vpop.f32.mrb[0].mxu0
        %767 = vdwg.mxu0
        %v768 = vadd.f32 %v691, %v765
        %769 = vst.msk [vmem:[%s690] sm:$0xff] %vm299, %v768
        %770 = vrot.lane.b32.xlu0 %v296, 32
        %v771 = vpop.permute.xlu0 %770
        %772 = vrot.lane.b32.xlu0 %v297, 32
        %v773 = vpop.permute.xlu0 %772
        %v774 = vsel %vm299, %v771, 0
        %v776 = vsel %vm299, %v773, 0
        %778 = vmatprep.subr.mxu0 0.0
        %779 = vmatpush1.xpose.msra.mxu0 %v776
        %780 = vmatprep.subr.mxu0 0.0
        %781 = vmatpush1.xpose.msra.mxu0 0.0
        %782 = vmatprep.subr.mxu0 0.0
        %783 = vmatpush1.xpose.msra.mxu0 0.0
        %784 = vmatprep.subr.mxu0 0.0
        %785 = vmatpush1.xpose.msra.mxu0 0.0
        %786 = vmatprep.subr.mxu0 0.0
        %787 = vmatpush1.xpose.msra.mxu0 0.0
        %788 = vmatprep.subr.mxu0 0.0
        %789 = vmatpush1.xpose.msra.mxu0 0.0
        %790 = vmatprep.subr.mxu0 0.0
        %791 = vmatpush1.xpose.msra.mxu0 0.0
        %792 = vmatprep.subr.mxu0 0.0
        %793 = vmatpush1.xpose.msra.mxu0 0.0
        %794 = vmatprep.subr.mxu0 0.0
        %795 = vmatpush1.xpose.msra.mxu0 0.0
        %796 = vmatprep.subr.mxu0 0.0
        %797 = vmatpush1.xpose.msra.mxu0 0.0
        %798 = vmatprep.subr.mxu0 0.0
        %799 = vmatpush1.xpose.msra.mxu0 0.0
        %800 = vmatprep.subr.mxu0 0.0
        %801 = vmatpush1.xpose.msra.mxu0 0.0
        %802 = vmatprep.subr.mxu0 0.0
        %803 = vmatpush1.xpose.msra.mxu0 0.0
        %804 = vmatprep.subr.mxu0 0.0
        %805 = vmatpush1.xpose.msra.mxu0 0.0
        %806 = vmatprep.subr.mxu0 0.0
        %807 = vmatpush1.xpose.msra.mxu0 0.0
        %808 = vmatprep.subr.mxu0 0.0
        %809 = vmatpush1.xpose.msra.mxu0 0.0
        %810 = vmatprep.subr.mxu0 0.0
        %811 = vmatpush1.xpose.msra.mxu0 0.0
        %812 = vmatprep.subr.mxu0 0.0
        %813 = vmatpush1.xpose.msra.mxu0 0.0
        %814 = vmatprep.subr.mxu0 0.0
        %815 = vmatpush1.xpose.msra.mxu0 0.0
        %816 = vmatprep.subr.mxu0 0.0
        %817 = vmatpush1.xpose.msra.mxu0 0.0
        %818 = vmatprep.subr.mxu0 0.0
        %819 = vmatpush1.xpose.msra.mxu0 0.0
        %820 = vmatprep.subr.mxu0 0.0
        %821 = vmatpush1.xpose.msra.mxu0 0.0
        %822 = vmatprep.subr.mxu0 0.0
        %823 = vmatpush1.xpose.msra.mxu0 0.0
        %824 = vmatprep.subr.mxu0 0.0
        %825 = vmatpush1.xpose.msra.mxu0 0.0
        %826 = vmatprep.subr.mxu0 0.0
        %827 = vmatpush1.xpose.msra.mxu0 0.0
        %828 = vmatprep.subr.mxu0 0.0
        %829 = vmatpush1.xpose.msra.mxu0 0.0
        %830 = vmatprep.subr.mxu0 0.0
        %831 = vmatpush1.xpose.msra.mxu0 0.0
        %832 = vmatprep.subr.mxu0 0.0
        %833 = vmatpush1.xpose.msra.mxu0 0.0
        %834 = vmatprep.subr.mxu0 0.0
        %835 = vmatpush1.xpose.msra.mxu0 0.0
        %836 = vmatprep.subr.mxu0 0.0
        %837 = vmatpush1.xpose.msra.mxu0 0.0
        %838 = vmatprep.subr.mxu0 0.0
        %839 = vmatpush1.xpose.msra.mxu0 0.0
        %840 = vmatprep.subr.mxu0 0.0
        %841 = vmatpush1.xpose.msra.mxu0 0.0
        %842 = vmatprep.mubr.f32.mxu0 0.0
        %843 = vmatmul.mubr.f32.gmra.mrb[0].mxu0 %v774
        %v844 = vpop.f32.mrb[0].mxu0
        %v845 = vadd.f32 0.0, %v844
        %v846 = vpop.f32.mrb[0].mxu0
        %847 = vdwg.mxu0
        %s848 = scalar_lea.vmem [#allocation2], 24
        %v849 = vld [vmem:[%s848] sm:$0xff]
        %850 = vrot.lane.b32.xlu0 %v298, 32
        %v851 = vpop.permute.xlu0 %850
        %v854 = vsel %vm377, %v845, 0
        %856 = vmatprep.subr.mxu0 0.0
        %857 = vmatpush1.msra.mxu0 %v851
        %858 = vmatprep.subr.mxu0 0.0
        %859 = vmatpush1.msra.mxu0 0.0
        %860 = vmatprep.subr.mxu0 0.0
        %861 = vmatpush1.msra.mxu0 0.0
        %862 = vmatprep.subr.mxu0 0.0
        %863 = vmatpush1.msra.mxu0 0.0
        %864 = vmatprep.subr.mxu0 0.0
        %865 = vmatpush1.msra.mxu0 0.0
        %866 = vmatprep.subr.mxu0 0.0
        %867 = vmatpush1.msra.mxu0 0.0
        %868 = vmatprep.subr.mxu0 0.0
        %869 = vmatpush1.msra.mxu0 0.0
        %870 = vmatprep.subr.mxu0 0.0
        %871 = vmatpush1.msra.mxu0 0.0
        %872 = vmatprep.subr.mxu0 0.0
        %873 = vmatpush1.msra.mxu0 0.0
        %874 = vmatprep.subr.mxu0 0.0
        %875 = vmatpush1.msra.mxu0 0.0
        %876 = vmatprep.subr.mxu0 0.0
        %877 = vmatpush1.msra.mxu0 0.0
        %878 = vmatprep.subr.mxu0 0.0
        %879 = vmatpush1.msra.mxu0 0.0
        %880 = vmatprep.subr.mxu0 0.0
        %881 = vmatpush1.msra.mxu0 0.0
        %882 = vmatprep.subr.mxu0 0.0
        %883 = vmatpush1.msra.mxu0 0.0
        %884 = vmatprep.subr.mxu0 0.0
        %885 = vmatpush1.msra.mxu0 0.0
        %886 = vmatprep.subr.mxu0 0.0
        %887 = vmatpush1.msra.mxu0 0.0
        %888 = vmatprep.subr.mxu0 0.0
        %889 = vmatpush1.msra.mxu0 0.0
        %890 = vmatprep.subr.mxu0 0.0
        %891 = vmatpush1.msra.mxu0 0.0
        %892 = vmatprep.subr.mxu0 0.0
        %893 = vmatpush1.msra.mxu0 0.0
        %894 = vmatprep.subr.mxu0 0.0
        %895 = vmatpush1.msra.mxu0 0.0
        %896 = vmatprep.subr.mxu0 0.0
        %897 = vmatpush1.msra.mxu0 0.0
        %898 = vmatprep.subr.mxu0 0.0
        %899 = vmatpush1.msra.mxu0 0.0
        %900 = vmatprep.subr.mxu0 0.0
        %901 = vmatpush1.msra.mxu0 0.0
        %902 = vmatprep.subr.mxu0 0.0
        %903 = vmatpush1.msra.mxu0 0.0
        %904 = vmatprep.subr.mxu0 0.0
        %905 = vmatpush1.msra.mxu0 0.0
        %906 = vmatprep.subr.mxu0 0.0
        %907 = vmatpush1.msra.mxu0 0.0
        %908 = vmatprep.subr.mxu0 0.0
        %909 = vmatpush1.msra.mxu0 0.0
        %910 = vmatprep.subr.mxu0 0.0
        %911 = vmatpush1.msra.mxu0 0.0
        %912 = vmatprep.subr.mxu0 0.0
        %913 = vmatpush1.msra.mxu0 0.0
        %914 = vmatprep.subr.mxu0 0.0
        %915 = vmatpush1.msra.mxu0 0.0
        %916 = vmatprep.subr.mxu0 0.0
        %917 = vmatpush1.msra.mxu0 0.0
        %918 = vmatprep.subr.mxu0 0.0
        %919 = vmatpush1.msra.mxu0 0.0
        %920 = vmatprep.mubr.f32.mxu0 0.0
        %921 = vmatmul.mubr.f32.gmra.mrb[0].mxu0 %v854
        %v922 = vpop.f32.mrb[0].mxu0
        %v923 = vadd.f32 0.0, %v922
        %v924 = vpop.f32.mrb[0].mxu0
        %925 = vdwg.mxu0
        %v926 = vadd.f32 %v849, %v923
        %927 = vst.msk [vmem:[%s848] sm:$0xff] %vm299, %v926
        // Predicated region
        $region49: #{tpu_custom_call.1} parent=31 // pred_check
          %p928 = pneg %p287
        $region50: #{tpu_custom_call.1} parent=31 // pred_check_branch
          %930 = sbr.rel (%p928) target = $region52
        $region51: #{tpu_custom_call.1} parent=31 // pred_region
          %v931 = vld [vmem:[#allocation2] sm:$0xff]
          %932 = vst.msk [vmem:[%s286] sm:$0xff] %vm299, %v931
          %v933 = vld [vmem:[%s531] sm:$0xff]
          %935 = vrot.lane.b32.xlu0 %v933, 32
          %v936 = vpop.permute.xlu0 %935
          %vm938 = vcmask 523520
          %939 = vst.msk [vmem:[%s286] sm:$0xff] %vm938, %v936
          %v940 = vld [vmem:[%s690] sm:$0xff]
          %942 = vrot.lane.b32.xlu0 %v940, 64
          %v943 = vpop.permute.xlu0 %942
          %vm945 = vcmask 785920
          %946 = vst.msk [vmem:[%s286] sm:$0xff] %vm945, %v943
          %v947 = vld [vmem:[%s848] sm:$0xff]
          %949 = vrot.lane.b32.xlu0 %v947, 96
          %v950 = vpop.permute.xlu0 %949
          %vm952 = vcmask 1048320
          %953 = vst.msk [vmem:[%s286] sm:$0xff] %vm952, %v950
        $region52: #{tpu_custom_call.1} parent=31 // pred_fallthru
          _
        %s954 = sand.u32 %s136, 1
        %s955 = scalar_lea.sflag [#allocation5], %s954
        %s956 = sand.u32 %s136, 1
        %s957 = smul.addr %s956, 8
        %s958 = scalar_lea.vmem [#allocation9], %s957
        // Predicated region
        $region53: #{tpu_custom_call.1} parent=31 // pred_check
          %p959 = pneg %p146
        $region54: #{tpu_custom_call.1} parent=31 // pred_check_branch
          %961 = sbr.rel (%p959) target = $region56
        $region55: #{tpu_custom_call.1} parent=31 // pred_region
          %s963 = ssub.s32 128, 128
          %964 = vsyncadd %s955, %s963
          %s965 = sadd.s32 %s29, %s28
          %s966 = smul.addr %s965, 128
          %s967 = scalar_lea.hbm %s3, %s966
          %s969 = sshll.u32 %s958, 4
          %s970 = int_to_ptr.vmem [resolvable:$true] %s969
          %972 = dma.vmem_to_hbm [thread:$0]  %s970, 128, %s967, %s955
        $region56: #{tpu_custom_call.1} parent=31 // pred_fallthru
          _
      $region32: #{tpu_custom_call.1} parent=5 // pred_fallthru
        _
      %p973 = scmp.le.s32.totalorder 2, %s18
      // Predicated region
      $region57: #{tpu_custom_call.1} parent=5 // pred_check
        %p974 = pneg %p973
      $region58: #{tpu_custom_call.1} parent=5 // pred_check_branch
        %976 = sbr.rel (%p974) target = $region60
      $region59: #{tpu_custom_call.1} parent=5 // pred_region
        %s977 = ssub.s32 %s18, 2
        // Predicated region
        $region61: #{tpu_custom_call.1} parent=59 // pred_check
          %p978 = pneg %p152
        $region62: #{tpu_custom_call.1} parent=59 // pred_check_branch
          %980 = sbr.rel (%p978) target = $region64
        $region63: #{tpu_custom_call.1} parent=59 // pred_region
          %s981 = sand.u32 %s137, 1
          %s982 = scalar_lea.sflag [#allocation5], %s981
          %s983 = sand.u32 %s137, 1
          %s984 = smul.addr %s983, 8
          %s985 = scalar_lea.vmem [#allocation9], %s984
          %986 = dma.done %s982, 128
        $region64: #{tpu_custom_call.1} parent=59 // pred_fallthru
          _
      $region60: #{tpu_custom_call.1} parent=5 // pred_fallthru
        _
    $region6: #{tpu_custom_call.1} parent=1 // loop_footer
      %s22 = sadd.s32 1, %s18
    $region7: #{tpu_custom_call.1} parent=1 // loop_footer_branch
      %17 = sbr.rel target = $region3
    $region8: #{tpu_custom_call.1} parent=1 // loop_exit
      _
    %987 = vsyncpa [#allocation4], 1
    %s988 = scalar_lea.sflag [#allocation4], 1
    %989 = vsyncpa %s988, 1
    %990 = vsyncpa [#allocation7], 1
    %s991 = scalar_lea.sflag [#allocation7], 1
    %992 = vsyncpa %s991, 1
    %993 = vsyncpa [#allocation5], 1
    %s994 = scalar_lea.sflag [#allocation5], 1
    %995 = vsyncpa %s994, 1

</llo_original>
